<compile_context>
chip_gen: v6e
topology: v6e:2x2x1
jax: 0.10.0
libtpu: 0.0.40
codegen_flags: <defaults>
</compile_context>

<pallas_src>
import jax
import jax.numpy as jnp
import numpy as np
from jax.experimental import pallas as pl
from jax.experimental.pallas import tpu as pltpu


def _round_up(x, m):
    return ((x + m - 1) // m) * m


def _vmem_block_bytes(block_shape, itemsize):
    """Padded VMEM footprint of a block: minor dim padded to 128 lanes,
    second-minor dim padded to the (dtype-packed) sublane tile."""
    if len(block_shape) == 1:
        return _round_up(int(block_shape[0]), 128) * itemsize
    *lead, m2, m1 = block_shape
    sub = 8 * max(1, 4 // itemsize)            # 8 for f32, 16 for bf16, ...
    n = 1
    for d in lead:
        n *= int(d)
    return n * _round_up(int(m2), sub) * _round_up(int(m1), 128) * itemsize


def _vmem_capacity_bytes():
    cap = 64 * 1024 * 1024                     # conservative: v7x per-TC VMEM
    try:
        cap = int(getattr(pltpu.get_tpu_info(), "vmem_capacity_bytes", cap))
    except Exception:
        pass
    return cap


def _pick_tiles(B, C, L, itemsize, target_bytes):
    """Pick (tb, tl) near the byte target using padded VMEM footprints.
    tb is a multiple of 8 or == B; tl is a multiple of 128 or == L (keeps the
    (8,128) BlockSpec rule satisfied). Grids use pl.cdiv, so no divisor-of-B
    requirement and partial trailing blocks are fine."""
    def blk(tb, tl):
        return _vmem_block_bytes((tb, C, tl), itemsize)

    if blk(B, L) <= target_bytes:
        return B, L                            # whole problem in one block
    row = max(1, blk(1, L))
    tb_cap = target_bytes // row
    if tb_cap >= 8:
        return min(B, (int(tb_cap) // 8) * 8), L
    # Even 8 full-L rows blow the target: thin batch tile + tile L as well.
    tb = B if B <= 8 else 8
    per_128 = max(1, _vmem_block_bytes((tb, C, 128), itemsize))
    tl_mult = max(1, int(target_bytes // per_128))
    tl = min(L, 128 * tl_mult)
    return tb, tl


def _make_avg_max_kernel(L_total, tl, needs_mask):
    inv_l = float(1.0 / L_total)

    def kernel(x_ref, o_ref, sum_acc, max_acc):
        # x_ref: (tb, C, tl) input block; o_ref: (2, tb, C) output block
        # (resident across the L axis); sum_acc/max_acc: (tb, C) f32 scratch.
        k = pl.program_id(1)

        @pl.when(k == 0)
        def _():
            sum_acc[...] = jnp.zeros(sum_acc.shape, sum_acc.dtype)
            max_acc[...] = jnp.full(max_acc.shape, -jnp.inf, max_acc.dtype)

        x = x_ref[...]                                         # (tb, C, tl)
        if needs_mask:
            pos = k * tl + jax.lax.broadcasted_iota(jnp.int32, x.shape, 2)
            valid = pos < L_total
            x_sum = jnp.where(valid, x, jnp.array(0, dtype=x.dtype))
            x_max = jnp.where(valid, x, jnp.array(-jnp.inf, dtype=x.dtype))
        else:
            x_sum = x
            x_max = x

        # f32 accumulation without a full-tile f32 copy of the input.
        sum_acc[...] += jnp.sum(x_sum, axis=-1, dtype=jnp.float32)
        max_acc[...] = jnp.maximum(
            max_acc[...], jnp.max(x_max, axis=-1).astype(jnp.float32))

        @pl.when(k == pl.num_programs(1) - 1)
        def _():
            o_ref[0] = (sum_acc[...] * inv_l).astype(o_ref.dtype)  # avg plane
            o_ref[1] = max_acc[...].astype(o_ref.dtype)            # max plane

    return kernel


def simple_concat_avg_max_tokens_pooler(tokens_embs, *, tb=None, tl=None):
    """tokens_embs: (B, C, L) float array. Returns (2B, C) = cat([avg, max], 0)."""
    B, C, L = tokens_embs.shape
    itemsize = jnp.dtype(tokens_embs.dtype).itemsize

    vmem_cap = _vmem_capacity_bytes()
    # ~8 MiB tiles on v7x (64 MiB VMEM), 16 MiB on v5e/v6e (128 MiB VMEM).
    target = max(2 * 1024 * 1024, min(16 * 1024 * 1024, vmem_cap // 8))
    tb_auto, tl_auto = _pick_tiles(B, C, L, itemsize, target)
    tb = tb_auto if tb is None else min(int(tb), B)
    tl = tl_auto if tl is None else min(int(tl), L)

    grid = (pl.cdiv(B, tb), pl.cdiv(L, tl))
    needs_mask = (L % tl) != 0

    # VMEM budget: double-buffered in/out blocks + f32 reduce intermediate
    # allowance + scratch accumulators + Mosaic internal headroom.
    in_blk = _vmem_block_bytes((tb, C, tl), itemsize)
    out_blk = _vmem_block_bytes((2, tb, C), itemsize)
    scratch_b = 2 * _vmem_block_bytes((tb, C), 4)
    f32_tmp = (in_blk * 4) // itemsize
    computed = 2 * in_blk + 2 * out_blk + scratch_b + f32_tmp + 4 * 1024 * 1024
    vmem_limit = int(min(max(vmem_cap - 16 * 1024 * 1024, 32 * 1024 * 1024),
                         max(computed, 24 * 1024 * 1024)))

    kernel = _make_avg_max_kernel(L, tl, needs_mask)

    # TODO(synk): for L << 128 / unaligned L, an NLC (B, L, C) input layout
    # (C on lanes, sublane reduction) would be lane-dense end-to-end; with the
    # module's NCL contract that needs an extra HBM transpose, so here only the
    # padded-footprint budgeting accounts for the lane padding.
    # TODO(synk): on v7x, try pltpu.CORE_PARALLEL on the batch axis and an MXU
    # ones-vector contraction for the sum if a bundle dump shows the reduce
    # chain exposed; on v5e/v6e the kernel is firmly HBM-bound.
    pooled = pl.pallas_call(
        kernel,
        out_shape=jax.ShapeDtypeStruct((2, B, C), tokens_embs.dtype),
        grid=grid,
        in_specs=[pl.BlockSpec((tb, C, tl), lambda b, k: (b, 0, k))],
        out_specs=pl.BlockSpec((2, tb, C), lambda b, k: (0, b, 0)),
        scratch_shapes=[pltpu.VMEM((tb, C), jnp.float32),    # f32 sum acc
                        pltpu.VMEM((tb, C), jnp.float32)],   # f32 max acc
        compiler_params=pltpu.CompilerParams(
            dimension_semantics=("parallel", "arbitrary"),
            vmem_limit_bytes=vmem_limit,
        ),
    )(tokens_embs)                                           # (2, B, C)

    # torch.cat([avg, max], dim=0): (2, B, C) -> (2B, C) is a free view.
    out = pooled.reshape(2 * B, C)
    # Trailing .squeeze() of the PyTorch forward (note: also drops C if C==1).
    return jnp.squeeze(out)


if __name__ == "__main__":
    key = jax.random.PRNGKey(0)

    # Main check: small shape consistent with the module: (B, C, L) = (2, 32, 8).
    B, C, L = 2, 32, 8
    x = jax.random.normal(key, (B, C, L), dtype=jnp.float32)
    out = jax.block_until_ready(simple_concat_avg_max_tokens_pooler(x))
    ref = jnp.concatenate([jnp.mean(x, axis=-1), jnp.max(x, axis=-1)], axis=0)
    assert out.shape == (2 * B, C), out.shape
    np.testing.assert_allclose(np.asarray(out), np.asarray(ref),
                               rtol=1e-6, atol=1e-6)

    # Secondary check: bf16 input with forced small tiles to exercise the
    # cdiv partial batch block, the L-axis reduction grid, and the tail mask.
    B2, C2, L2 = 10, 128, 320
    x2 = jax.random.normal(jax.random.PRNGKey(1), (B2, C2, L2),
                           dtype=jnp.bfloat16)
    out2 = jax.block_until_ready(
        simple_concat_avg_max_tokens_pooler(x2, tb=8, tl=128))
    x2f = x2.astype(jnp.float32)
    ref2 = jnp.concatenate([jnp.mean(x2f, axis=-1), jnp.max(x2f, axis=-1)],
                           axis=0)
    assert out2.shape == (2 * B2, C2), out2.shape
    np.testing.assert_allclose(np.asarray(out2.astype(jnp.float32)),
                               np.asarray(ref2), rtol=2e-2, atol=2e-2)

    print("KERNEL_OK")
</pallas_src>

<mosaic_0001>
module attributes {stable_mosaic.version = 11 : i64} {
  func.func @kernel(%arg0: i32, %arg1: i32, %arg2: memref<2x32x8xf32, #tpu.memory_space<vmem>>, %arg3: memref<2x2x32xf32, #tpu.memory_space<vmem>>, %arg4: memref<2x32xf32, #tpu.memory_space<vmem>>, %arg5: memref<2x32xf32, #tpu.memory_space<vmem>>) attributes {dimension_semantics = [#tpu.dimension_semantics<parallel>, #tpu.dimension_semantics<arbitrary>], iteration_bounds = array<i64: 1, 1>, scalar_prefetch = 0 : i64, scratch_operands = 2 : i64, tpu.core_type = #tpu.core_type<tc>, window_params = [{transform_indices = @transform_0, window_bounds = array<i64: 2, 32, 8>}, {transform_indices = @transform_1, window_bounds = array<i64: 2, 2, 32>}]} {
    %c0_i32 = arith.constant 0 : i32
    %0 = arith.cmpi eq, %arg1, %c0_i32 : i32
    %1 = arith.extui %0 : i1 to i32
    %c0_i32_0 = arith.constant 0 : i32
    %2 = arith.cmpi ne, %1, %c0_i32_0 : i32
    scf.if %2 {
      %cst_14 = arith.constant 0.000000e+00 : f32
      %15 = vector.broadcast %cst_14 : f32 to vector<2x32xf32>
      %c0_15 = arith.constant 0 : index
      %c0_16 = arith.constant 0 : index
      %16 = vector.load %arg4[%c0_15, %c0_16] : memref<2x32xf32, #tpu.memory_space<vmem>>, vector<2x32xf32>
      tpu.vector_store %arg4[%c0_15, %c0_16], %15 {strides = array<i32>} : memref<2x32xf32, #tpu.memory_space<vmem>>, vector<2x32xf32>,
      %cst_17 = arith.constant 0xFF800000 : f32
      %17 = vector.broadcast %cst_17 : f32 to vector<2x32xf32>
      %c0_18 = arith.constant 0 : index
      %c0_19 = arith.constant 0 : index
      %18 = vector.load %arg5[%c0_18, %c0_19] : memref<2x32xf32, #tpu.memory_space<vmem>>, vector<2x32xf32>
      tpu.vector_store %arg5[%c0_18, %c0_19], %17 {strides = array<i32>} : memref<2x32xf32, #tpu.memory_space<vmem>>, vector<2x32xf32>,
    } else {
    }
    %c0 = arith.constant 0 : index
    %c0_1 = arith.constant 0 : index
    %c0_2 = arith.constant 0 : index
    %3 = vector.load %arg2[%c0, %c0_1, %c0_2] : memref<2x32x8xf32, #tpu.memory_space<vmem>>, vector<2x32x8xf32>
    %c0_3 = arith.constant 0 : index
    %c0_4 = arith.constant 0 : index
    %4 = vector.load %arg4[%c0_3, %c0_4] : memref<2x32xf32, #tpu.memory_space<vmem>>, vector<2x32xf32>
    %cst = arith.constant dense<0.000000e+00> : vector<2x32xf32>
    %5 = vector.multi_reduction <add>, %3, %cst [2] : vector<2x32x8xf32> to vector<2x32xf32>
    %6 = arith.addf %4, %5 : vector<2x32xf32>
    %c0_5 = arith.constant 0 : index
    %c0_6 = arith.constant 0 : index
    %7 = vector.load %arg4[%c0_5, %c0_6] : memref<2x32xf32, #tpu.memory_space<vmem>>, vector<2x32xf32>
    tpu.vector_store %arg4[%c0_5, %c0_6], %6 {strides = array<i32>} : memref<2x32xf32, #tpu.memory_space<vmem>>, vector<2x32xf32>,
    %c0_7 = arith.constant 0 : index
    %c0_8 = arith.constant 0 : index
    %8 = vector.load %arg5[%c0_7, %c0_8] : memref<2x32xf32, #tpu.memory_space<vmem>>, vector<2x32xf32>
    %cst_9 = arith.constant dense<0xFF800000> : vector<2x32xf32>
    %9 = vector.multi_reduction <maximumf>, %3, %cst_9 [2] : vector<2x32x8xf32> to vector<2x32xf32>
    %10 = arith.maximumf %8, %9 : vector<2x32xf32>
    %c0_10 = arith.constant 0 : index
    %c0_11 = arith.constant 0 : index
    %11 = vector.load %arg5[%c0_10, %c0_11] : memref<2x32xf32, #tpu.memory_space<vmem>>, vector<2x32xf32>
    tpu.vector_store %arg5[%c0_10, %c0_11], %10 {strides = array<i32>} : memref<2x32xf32, #tpu.memory_space<vmem>>, vector<2x32xf32>,
    %c0_i32_12 = arith.constant 0 : i32
    %12 = arith.cmpi eq, %arg1, %c0_i32_12 : i32
    %13 = arith.extui %12 : i1 to i32
    %c0_i32_13 = arith.constant 0 : i32
    %14 = arith.cmpi ne, %13, %c0_i32_13 : i32
    scf.if %14 {
      %c0_14 = arith.constant 0 : index
      %c0_15 = arith.constant 0 : index
      %15 = vector.load %arg4[%c0_14, %c0_15] : memref<2x32xf32, #tpu.memory_space<vmem>>, vector<2x32xf32>
      %cst_16 = arith.constant 1.250000e-01 : f32
      %16 = vector.broadcast %cst_16 : f32 to vector<2x32xf32>
      %17 = arith.mulf %15, %16 : vector<2x32xf32>
      %c0_17 = arith.constant 0 : index
      %c0_18 = arith.constant 0 : index
      %c0_19 = arith.constant 0 : index
      %18 = vector.load %arg3[%c0_17, %c0_18, %c0_19] : memref<2x2x32xf32, #tpu.memory_space<vmem>>, vector<1x2x32xf32>
      %19 = vector.shape_cast %18 : vector<1x2x32xf32> to vector<2x32xf32>
      %20 = vector.shape_cast %17 : vector<2x32xf32> to vector<1x2x32xf32>
      tpu.vector_store %arg3[%c0_17, %c0_18, %c0_19], %20 {strides = array<i32>} : memref<2x2x32xf32, #tpu.memory_space<vmem>>, vector<1x2x32xf32>,
      %c0_20 = arith.constant 0 : index
      %c0_21 = arith.constant 0 : index
      %21 = vector.load %arg5[%c0_20, %c0_21] : memref<2x32xf32, #tpu.memory_space<vmem>>, vector<2x32xf32>
      %c1 = arith.constant 1 : index
      %c0_22 = arith.constant 0 : index
      %c0_23 = arith.constant 0 : index
      %22 = vector.load %arg3[%c1, %c0_22, %c0_23] : memref<2x2x32xf32, #tpu.memory_space<vmem>>, vector<1x2x32xf32>
      %23 = vector.shape_cast %22 : vector<1x2x32xf32> to vector<2x32xf32>
      %24 = vector.shape_cast %21 : vector<2x32xf32> to vector<1x2x32xf32>
      tpu.vector_store %arg3[%c1, %c0_22, %c0_23], %24 {strides = array<i32>} : memref<2x2x32xf32, #tpu.memory_space<vmem>>, vector<1x2x32xf32>,
    } else {
    }
    return
  }
  func.func @transform_0(%arg0: i32, %arg1: i32) -> (i32, i32, i32) {
    %c0_i32 = arith.constant 0 : i32
    %c0_i32_0 = arith.constant 0 : i32
    return %arg0, %c0_i32, %arg1 : i32, i32, i32
  }
  func.func @transform_1(%arg0: i32, %arg1: i32) -> (i32, i32, i32) {
    %c0_i32 = arith.constant 0 : i32
    %c0_i32_0 = arith.constant 0 : i32
    %c0_i32_1 = arith.constant 0 : i32
    return %c0_i32, %arg0, %c0_i32_0 : i32, i32, i32
  }
}

</mosaic_0001>

<llo_original>
// kernel: tpu_custom_call.1
$region0: #{tpu_custom_call.1}
  #allocation0 [shape = 'u32[]', space=smem, size = 0x4, offset = 0x4, fixed_abs, tag = 'smem constant byte address 0x4 - core index']
  #allocation1 [shape = 'u32[144,128]{1,0:T(1,128)}', space=vmem, size = 0x12000, scoped, tag = 'internal scratch']
  #allocation2 [shape = 'f32[2,32]{1,0:T(2,128)}', space=vmem, size = 0x400, scoped, tag = 'scratch operand']
  #allocation3 [shape = 'f32[2,32]{1,0:T(2,128)}', space=vmem, size = 0x400, scoped, tag = 'scratch operand']
  %s0 = inlined_call_operand.vmem [shape: f32[2,32,8], index: 0, kind: input, shape index: {}]
  %s1 = inlined_call_operand.hbm [shape: f32[2,2,32], index: 1, kind: output, shape index: {}]
  %s2 = sld [smem:[#allocation0]]
  $region22: #{tpu_custom_call.1} parent=0
    _
  %s4 = ssub.s32 1, %s2
  %s5 = scalar_select 0, %s4, %s2
  $region1: #{tpu_custom_call.1} parent=0
    #allocation4 [shape = 'u8[2048]{0}', space=vmem, size = 0x800, scoped, tag = 'output window, operand 0, single buffered']
    #allocation5 [shape = 's32[1]{0}', space=sflag, size = 0x4, scoped, tag = 'scoped memory for tpu_custom_call.1']
    %6 = vsyncpa [#allocation5], 0
    // Predicated region
    $region2: #{tpu_custom_call.1} parent=1 // pred_check
      _
    $region3: #{tpu_custom_call.1} parent=1 // pred_check_branch
      %8 = sbr.rel (0) target = $region5
    $region4: #{tpu_custom_call.1} parent=1 // pred_region
      _
    $region5: #{tpu_custom_call.1} parent=1 // pred_fallthru
      _
    %p9 = scmp.eq.s32.totalorder 0, 0
    // Predicated region
    $region6: #{tpu_custom_call.1} parent=1 // pred_check
      %p10 = pneg %p9
    $region7: #{tpu_custom_call.1} parent=1 // pred_check_branch
      %12 = sbr.rel (%p10) target = $region9
    $region8: #{tpu_custom_call.1} parent=1 // pred_region
      %vm13 = vcmask 254976
      %14 = vst.msk [vmem:[#allocation2] sm:$0x3] %vm13, 0.0
      %15 = vst.msk [vmem:[#allocation3] sm:$0x3] %vm13, -inf
    $region9: #{tpu_custom_call.1} parent=1 // pred_fallthru
      _
    %v16 = vld [vmem:[%s0] sm:$0xff]
    %v17 = vld [vmem:[%s0 + $0x8] sm:$0xff]
    %v18 = vld [vmem:[%s0 + $0x10] sm:$0xff]
    %v19 = vld [vmem:[%s0 + $0x18] sm:$0xff]
    %v20 = vld [vmem:[%s0 + $0x20] sm:$0xff]
    %v21 = vld [vmem:[%s0 + $0x28] sm:$0xff]
    %v22 = vld [vmem:[%s0 + $0x30] sm:$0xff]
    %v23 = vld [vmem:[%s0 + $0x38] sm:$0xff]
    %v24 = vld [vmem:[#allocation2] sm:$0x3]
    %vm25 = vcmask 64512
    %v26 = vsel %vm25, %v16, 0.0
    %27 = vadd.xlane.f32.xlu0 %v26
    %v28 = vpop.xlane.xlu0 %27
    %v29 = vsel %vm25, %v17, 0.0
    %30 = vadd.xlane.f32.xlu0 %v29
    %v31 = vpop.xlane.xlu0 %30
    %v32 = vsel %vm25, %v18, 0.0
    %33 = vadd.xlane.f32.xlu0 %v32
    %v34 = vpop.xlane.xlu0 %33
    %v35 = vsel %vm25, %v19, 0.0
    %36 = vadd.xlane.f32.xlu0 %v35
    %v37 = vpop.xlane.xlu0 %36
    %v38 = vsel %vm25, %v20, 0.0
    %39 = vadd.xlane.f32.xlu0 %v38
    %v40 = vpop.xlane.xlu0 %39
    %v41 = vsel %vm25, %v21, 0.0
    %42 = vadd.xlane.f32.xlu0 %v41
    %v43 = vpop.xlane.xlu0 %42
    %v44 = vsel %vm25, %v22, 0.0
    %45 = vadd.xlane.f32.xlu0 %v44
    %v46 = vpop.xlane.xlu0 %45
    %v47 = vsel %vm25, %v23, 0.0
    %48 = vadd.xlane.f32.xlu0 %v47
    %v49 = vpop.xlane.xlu0 %48
    %v58 = vlaneseq
    %v59 = vand.u32 %v58, 127
    %v60 = vlaneseq
    %v61 = vshrl.u32 %v60, 7
    %v62 = vsub.s32 %v59, %v61
    %v63 = vrot.slane %v28, %v62
    %v64 = vadd.s32 %v59, 4294967288
    %v65 = vlaneseq
    %v66 = vshrl.u32 %v65, 7
    %v67 = vsub.s32 %v64, %v66
    %v68 = vrot.slane %v31, %v67
    %vm69 = vcmask 130112
    %v70 = vsel %vm69, %v68, %v63
    %v71 = vadd.s32 %v59, 4294967280
    %v72 = vlaneseq
    %v73 = vshrl.u32 %v72, 7
    %v74 = vsub.s32 %v71, %v73
    %v75 = vrot.slane %v34, %v74
    %vm76 = vcmask 195712
    %v77 = vsel %vm76, %v75, %v70
    %v78 = vadd.s32 %v59, 4294967272
    %v79 = vlaneseq
    %v80 = vshrl.u32 %v79, 7
    %v81 = vsub.s32 %v78, %v80
    %v82 = vrot.slane %v37, %v81
    %vm83 = vcmask 261312
    %v84 = vsel %vm83, %v82, %v77
    %v85 = vlaneseq
    %v86 = vshrl.u32 %v85, 7
    %v87 = vsub.s32 %v59, %v86
    %v88 = vrot.slane %v40, %v87
    %v89 = vlaneseq
    %v90 = vshrl.u32 %v89, 7
    %v91 = vsub.s32 %v64, %v90
    %v92 = vrot.slane %v43, %v91
    %v93 = vsel %vm69, %v92, %v88
    %v94 = vlaneseq
    %v95 = vshrl.u32 %v94, 7
    %v96 = vsub.s32 %v71, %v95
    %v97 = vrot.slane %v46, %v96
    %v98 = vsel %vm76, %v97, %v93
    %v99 = vlaneseq
    %v100 = vshrl.u32 %v99, 7
    %v101 = vsub.s32 %v78, %v100
    %v102 = vrot.slane %v49, %v101
    %v103 = vsel %vm83, %v102, %v98
    %vm104 = vcmask 1041409
    %v105 = vsel %vm104, %v103, %v84
    %v107 = vadd.f32 %v24, %v105
    %vm108 = vcmask 254976
    %109 = vst.msk [vmem:[#allocation2] sm:$0x3] %vm108, %v107
    %v110 = vld [vmem:[#allocation3] sm:$0x3]
    %v111 = vsel %vm25, %v16, -inf
    %112 = vmax.xlane.f32.xlu0 %v111
    %v113 = vpop.xlane.xlu0 %112
    %v114 = vsel %vm25, %v17, -inf
    %115 = vmax.xlane.f32.xlu0 %v114
    %v116 = vpop.xlane.xlu0 %115
    %v117 = vsel %vm25, %v18, -inf
    %118 = vmax.xlane.f32.xlu0 %v117
    %v119 = vpop.xlane.xlu0 %118
    %v120 = vsel %vm25, %v19, -inf
    %121 = vmax.xlane.f32.xlu0 %v120
    %v122 = vpop.xlane.xlu0 %121
    %v123 = vsel %vm25, %v20, -inf
    %124 = vmax.xlane.f32.xlu0 %v123
    %v125 = vpop.xlane.xlu0 %124
    %v126 = vsel %vm25, %v21, -inf
    %127 = vmax.xlane.f32.xlu0 %v126
    %v128 = vpop.xlane.xlu0 %127
    %v129 = vsel %vm25, %v22, -inf
    %130 = vmax.xlane.f32.xlu0 %v129
    %v131 = vpop.xlane.xlu0 %130
    %v132 = vsel %vm25, %v23, -inf
    %133 = vmax.xlane.f32.xlu0 %v132
    %v134 = vpop.xlane.xlu0 %133
    %v143 = vlaneseq
    %v144 = vshrl.u32 %v143, 7
    %v145 = vsub.s32 %v59, %v144
    %v146 = vrot.slane %v113, %v145
    %v147 = vlaneseq
    %v148 = vshrl.u32 %v147, 7
    %v149 = vsub.s32 %v64, %v148
    %v150 = vrot.slane %v116, %v149
    %v151 = vsel %vm69, %v150, %v146
    %v152 = vlaneseq
    %v153 = vshrl.u32 %v152, 7
    %v154 = vsub.s32 %v71, %v153
    %v155 = vrot.slane %v119, %v154
    %v156 = vsel %vm76, %v155, %v151
    %v157 = vlaneseq
    %v158 = vshrl.u32 %v157, 7
    %v159 = vsub.s32 %v78, %v158
    %v160 = vrot.slane %v122, %v159
    %v161 = vsel %vm83, %v160, %v156
    %v162 = vlaneseq
    %v163 = vshrl.u32 %v162, 7
    %v164 = vsub.s32 %v59, %v163
    %v165 = vrot.slane %v125, %v164
    %v166 = vlaneseq
    %v167 = vshrl.u32 %v166, 7
    %v168 = vsub.s32 %v64, %v167
    %v169 = vrot.slane %v128, %v168
    %v170 = vsel %vm69, %v169, %v165
    %v171 = vlaneseq
    %v172 = vshrl.u32 %v171, 7
    %v173 = vsub.s32 %v71, %v172
    %v174 = vrot.slane %v131, %v173
    %v175 = vsel %vm76, %v174, %v170
    %v176 = vlaneseq
    %v177 = vshrl.u32 %v176, 7
    %v178 = vsub.s32 %v78, %v177
    %v179 = vrot.slane %v134, %v178
    %v180 = vsel %vm83, %v179, %v175
    %v181 = vsel %vm104, %v180, %v161
    %v183 = vmax.f32 %v110, %v181
    %184 = vst.msk [vmem:[#allocation3] sm:$0x3] %vm108, %v183
    // Predicated region
    $region10: #{tpu_custom_call.1} parent=1 // pred_check
      %p185 = pneg %p9
    $region11: #{tpu_custom_call.1} parent=1 // pred_check_branch
      %187 = sbr.rel (%p185) target = $region13
    $region12: #{tpu_custom_call.1} parent=1 // pred_region
      %v188 = vld [vmem:[#allocation2] sm:$0x3]
      %v189 = vmul.f32 %v188, 0.125
      %190 = vst.msk [vmem:[#allocation4] sm:$0x3] %vm108, %v189
      %v191 = vld [vmem:[#allocation3] sm:$0x3]
      %s192 = scalar_lea.vmem [#allocation4], 2
      %193 = vst.msk [vmem:[%s192] sm:$0x3] %vm108, %v191
    $region13: #{tpu_custom_call.1} parent=1 // pred_fallthru
      _
    // Predicated region
    $region14: #{tpu_custom_call.1} parent=1 // pred_check
      _
    $region15: #{tpu_custom_call.1} parent=1 // pred_check_branch
      %195 = sbr.rel (0) target = $region17
    $region16: #{tpu_custom_call.1} parent=1 // pred_region
      %s197 = ssub.s32 64, 64
      %198 = vsyncadd [#allocation5], %s197
      %s199 = sshll.u32 [#allocation4], 4
      %s200 = int_to_ptr.vmem [resolvable:$true] %s199
      %205 = dma.vmem_to_hbm [thread:$0]  %s200, 64, %s1, [#allocation5], 32, 32, 2
    $region17: #{tpu_custom_call.1} parent=1 // pred_fallthru
      _
    // Predicated region
    $region18: #{tpu_custom_call.1} parent=1 // pred_check
      _
    $region19: #{tpu_custom_call.1} parent=1 // pred_check_branch
      %207 = sbr.rel (0) target = $region21
    $region20: #{tpu_custom_call.1} parent=1 // pred_region
      %208 = dma.done [#allocation5], 64
    $region21: #{tpu_custom_call.1} parent=1 // pred_fallthru
      _
    %209 = vsyncpa [#allocation5], 1

</llo_original>
